<compile_context>
chip_gen: v5e
topology: v5e:2x2
jax: 0.10.0
libtpu: 0.0.40
codegen_flags: <defaults>
</compile_context>

<pallas_src>
import functools

import jax
import jax.numpy as jnp
from jax.experimental import pallas as pl
from jax.experimental.pallas import tpu as pltpu

NEG_SLOPE = 0.01  # PyTorch nn.LeakyReLU default


def _leaky_relu(v):
    # identical to where(v>0, v, slope*v) for 0 < slope < 1, cheaper on the VPU
    return jnp.maximum(v, NEG_SLOPE * v)


def _round_up(n, m):
    return ((n + m - 1) // m) * m


def _pad2d(a, rows, cols):
    pr, pc = rows - a.shape[0], cols - a.shape[1]
    if pr or pc:
        a = jnp.pad(a, ((0, pr), (0, pc)))
    return a


def _make_mlp_kernel(hidden_layers: int):
    """Kernel closure for a fixed number of residual hidden blocks.

    Ref order:
      x,                                   # (TILE_B, IN_P)    bf16
      w_in, b_in,                          # encoder Linear    bf16 / f32
      (w_h[i], b_h[i]) * hidden_layers,    # residual blocks   bf16 / f32
      w_d1, b_d1, w_d2, b_d2,              # decoder Linears   bf16 / f32
      out                                  # (TILE_B, OUT_P)   f32
    """

    def kernel(*refs):
        x_ref = refs[0]
        w_in_ref, b_in_ref = refs[1], refs[2]
        block_refs = refs[3:3 + 2 * hidden_layers]
        w_d1_ref, b_d1_ref, w_d2_ref, b_d2_ref = refs[3 + 2 * hidden_layers:
                                                      7 + 2 * hidden_layers]
        out_ref = refs[7 + 2 * hidden_layers]

        x = x_ref[...]  # bf16

        # encoder: Linear + LeakyReLU (accumulate f32, epilogue f32)
        b_in = b_in_ref[...]
        h = _leaky_relu(
            jnp.dot(x, w_in_ref[...], preferred_element_type=jnp.float32)
            + b_in
        )  # f32 (TILE_B, HID_P)

        # hidden residual blocks: Linear + (Dropout=identity) + LeakyReLU + skip
        for i in range(hidden_layers):
            w = block_refs[2 * i][...]          # bf16, resident
            b = block_refs[2 * i + 1][...]      # f32, loaded once per layer
            blk = _leaky_relu(
                jnp.dot(h.astype(w.dtype), w,
                        preferred_element_type=jnp.float32)
                + b
            )
            h = blk + h                          # residual add in f32

        # decoder: Linear + LeakyReLU + Linear (final_activation = None)
        w_d1 = w_d1_ref[...]
        d = _leaky_relu(
            jnp.dot(h.astype(w_d1.dtype), w_d1,
                    preferred_element_type=jnp.float32)
            + b_d1_ref[...]
        )
        w_d2 = w_d2_ref[...]
        out = (
            jnp.dot(d.astype(w_d2.dtype), w_d2,
                    preferred_element_type=jnp.float32)
            + b_d2_ref[...]
        )
        out_ref[...] = out.astype(out_ref.dtype)

    return kernel


def fully_connected_model_forward(x, params, hidden_layers: int, tile_b=None):
    """params: w_in, b_in, w_h (list), b_h (list), w_d1, b_d1, w_d2, b_d2.
    Weights are [in_features, out_features] (transposed vs nn.Linear);
    biases [1, out]."""
    batch, in_ch = x.shape
    hid = params["w_in"].shape[1]
    dec = params["w_d1"].shape[1]
    out_ch = params["w_d2"].shape[1]

    # lane-dense padding of every feature dim to a multiple of 128
    IN_P = _round_up(in_ch, 128)
    HID_P = _round_up(hid, 128)
    DEC_P = _round_up(dec, 128)
    OUT_P = _round_up(out_ch, 128)

    # batch tile: multiple of 8 sublanes, up to 256 rows per grid step
    if tile_b is None:
        tile_b = min(256, _round_up(batch, 8))
    tile_b = _round_up(tile_b, 8)
    batch_p = _round_up(batch, tile_b)
    grid = (batch_p // tile_b,)

    wdt = jnp.bfloat16  # MXU-native dtype; halves weight HBM/VMEM traffic
    x_p = _pad2d(x, batch_p, IN_P).astype(wdt)
    w_in = _pad2d(params["w_in"], IN_P, HID_P).astype(wdt)
    b_in = _pad2d(params["b_in"], 1, HID_P).astype(jnp.float32)
    w_h = [_pad2d(w, HID_P, HID_P).astype(wdt) for w in params["w_h"]]
    b_h = [_pad2d(b, 1, HID_P).astype(jnp.float32) for b in params["b_h"]]
    w_d1 = _pad2d(params["w_d1"], HID_P, DEC_P).astype(wdt)
    b_d1 = _pad2d(params["b_d1"], 1, DEC_P).astype(jnp.float32)
    w_d2 = _pad2d(params["w_d2"], DEC_P, OUT_P).astype(wdt)
    b_d2 = _pad2d(params["b_d2"], 1, OUT_P).astype(jnp.float32)

    flat_inputs = [x_p, w_in, b_in]
    for i in range(hidden_layers):
        flat_inputs += [w_h[i], b_h[i]]
    flat_inputs += [w_d1, b_d1, w_d2, b_d2]

    # x/out tiled over batch; weights & biases resident across all grid steps
    def resident_spec(a):
        return pl.BlockSpec(a.shape, lambda i: (0, 0))

    in_specs = [pl.BlockSpec((tile_b, IN_P), lambda i: (i, 0))]
    in_specs += [resident_spec(a) for a in flat_inputs[1:]]
    out_spec = pl.BlockSpec((tile_b, OUT_P), lambda i: (i, 0))

    # advisory cost estimate for XLA scheduling around the custom call
    flops = 2 * batch_p * (IN_P * HID_P + hidden_layers * HID_P * HID_P
                           + HID_P * DEC_P + DEC_P * OUT_P)
    bytes_accessed = (sum(int(a.size) * a.dtype.itemsize for a in flat_inputs)
                      + batch_p * OUT_P * 4)
    cost = pl.CostEstimate(flops=flops, transcendentals=0,
                           bytes_accessed=bytes_accessed)

    # explicit VMEM budget: resident weights + double-buffered x/out tiles
    # + f32 activation working set, with 2x headroom, clamped for v7x (64 MiB).
    # TODO(synk): for very large hidden_channels/hidden_layers the resident
    # weights should instead be stacked [L, H, H] and streamed per layer.
    weight_bytes = sum(int(a.size) * a.dtype.itemsize for a in flat_inputs[1:])
    tile_bytes = tile_b * (IN_P * 2 + OUT_P * 4)
    act_bytes = 4 * tile_b * max(HID_P, DEC_P) * 4
    vmem_limit = int(min(100 * 1024 * 1024,
                         max(32 * 1024 * 1024,
                             2 * (weight_bytes + 2 * tile_bytes + act_bytes))))

    kernel = _make_mlp_kernel(hidden_layers)
    out_p = pl.pallas_call(
        kernel,
        out_shape=jax.ShapeDtypeStruct((batch_p, OUT_P), jnp.float32),
        grid=grid,
        in_specs=in_specs,
        out_specs=out_spec,
        compiler_params=pltpu.CompilerParams(
            dimension_semantics=("parallel",),
            vmem_limit_bytes=vmem_limit),
        cost_estimate=cost,
    )(*flat_inputs)

    return out_p[:batch, :out_ch]


def init_params(key, in_channels, out_channels, hidden_channels,
                decode_channels, hidden_layers):
    """PyTorch-style uniform(-1/sqrt(fan_in), 1/sqrt(fan_in)) init.
    Weights stored transposed ([in, out]) relative to nn.Linear."""

    def linear(k, fan_in, fan_out):
        kw, kb = jax.random.split(k)
        bound = 1.0 / jnp.sqrt(fan_in)
        w = jax.random.uniform(kw, (fan_in, fan_out), jnp.float32, -bound, bound)
        b = jax.random.uniform(kb, (1, fan_out), jnp.float32, -bound, bound)
        return w, b

    keys = jax.random.split(key, hidden_layers + 3)
    w_in, b_in = linear(keys[0], in_channels, hidden_channels)
    w_h, b_h = [], []
    for i in range(hidden_layers):
        w, b = linear(keys[1 + i], hidden_channels, hidden_channels)
        w_h.append(w)
        b_h.append(b)
    w_d1, b_d1 = linear(keys[hidden_layers + 1], hidden_channels, decode_channels)
    w_d2, b_d2 = linear(keys[hidden_layers + 2], decode_channels, out_channels)
    return dict(w_in=w_in, b_in=b_in, w_h=w_h, b_h=b_h,
                w_d1=w_d1, b_d1=b_d1, w_d2=w_d2, b_d2=b_d2)


def reference_forward(x, params, hidden_layers):
    """Pure-JAX reference mirroring the kernel's bf16-matmul / f32-epilogue path."""
    wdt = jnp.bfloat16

    def mm(a, w):
        return jnp.dot(a.astype(wdt), w.astype(wdt),
                       preferred_element_type=jnp.float32)

    h = _leaky_relu(mm(x, params["w_in"]) + params["b_in"])
    for i in range(hidden_layers):
        h = _leaky_relu(mm(h, params["w_h"][i]) + params["b_h"][i]) + h
    d = _leaky_relu(mm(h, params["w_d1"]) + params["b_d1"])
    return mm(d, params["w_d2"]) + params["b_d2"]


if __name__ == "__main__":
    # small shapes consistent with the module's forward (Linear: [batch, features])
    batch = 8
    in_channels = 16
    hidden_channels = 32
    decode_channels = 24
    out_channels = 8
    hidden_layers = 2
    # p_dropout has no effect in inference forward (Dropout = identity)
    # final_activation = None (decoder ends with a plain Linear)

    key = jax.random.PRNGKey(0)
    k_x, k_p = jax.random.split(key)
    x = jax.random.normal(k_x, (batch, in_channels), jnp.float32)
    params = init_params(k_p, in_channels, out_channels, hidden_channels,
                         decode_channels, hidden_layers)

    fwd = jax.jit(functools.partial(fully_connected_model_forward,
                                    hidden_layers=hidden_layers))
    out = fwd(x, params)
    jax.block_until_ready(out)

    ref = reference_forward(x, params, hidden_layers)
    assert out.shape == (batch, out_channels)
    assert jnp.allclose(out, ref, atol=1e-2, rtol=1e-2), (
        float(jnp.max(jnp.abs(out - ref))))

    print("KERNEL_OK")
</pallas_src>

<mosaic_0001>
module attributes {stable_mosaic.version = 11 : i64} {
  func.func @kernel(%arg0: i32, %arg1: memref<8x128xbf16, #tpu.memory_space<vmem>>, %arg2: memref<128x128xbf16, #tpu.memory_space<vmem>>, %arg3: memref<1x128xf32, #tpu.memory_space<vmem>>, %arg4: memref<128x128xbf16, #tpu.memory_space<vmem>>, %arg5: memref<1x128xf32, #tpu.memory_space<vmem>>, %arg6: memref<128x128xbf16, #tpu.memory_space<vmem>>, %arg7: memref<1x128xf32, #tpu.memory_space<vmem>>, %arg8: memref<128x128xbf16, #tpu.memory_space<vmem>>, %arg9: memref<1x128xf32, #tpu.memory_space<vmem>>, %arg10: memref<128x128xbf16, #tpu.memory_space<vmem>>, %arg11: memref<1x128xf32, #tpu.memory_space<vmem>>, %arg12: memref<8x128xf32, #tpu.memory_space<vmem>>) attributes {dimension_semantics = [#tpu.dimension_semantics<parallel>], iteration_bounds = array<i64: 1>, scalar_prefetch = 0 : i64, scratch_operands = 0 : i64, tpu.core_type = #tpu.core_type<tc>, window_params = [{transform_indices = @transform_0, window_bounds = array<i64: 8, 128>}, {pipeline_mode = #tpu.pipeline_mode<synchronous>, transform_indices = @transform_1, window_bounds = array<i64: 128, 128>}, {pipeline_mode = #tpu.pipeline_mode<synchronous>, transform_indices = @transform_2, window_bounds = array<i64: 1, 128>}, {pipeline_mode = #tpu.pipeline_mode<synchronous>, transform_indices = @transform_3, window_bounds = array<i64: 128, 128>}, {pipeline_mode = #tpu.pipeline_mode<synchronous>, transform_indices = @transform_4, window_bounds = array<i64: 1, 128>}, {pipeline_mode = #tpu.pipeline_mode<synchronous>, transform_indices = @transform_5, window_bounds = array<i64: 128, 128>}, {pipeline_mode = #tpu.pipeline_mode<synchronous>, transform_indices = @transform_6, window_bounds = array<i64: 1, 128>}, {pipeline_mode = #tpu.pipeline_mode<synchronous>, transform_indices = @transform_7, window_bounds = array<i64: 128, 128>}, {pipeline_mode = #tpu.pipeline_mode<synchronous>, transform_indices = @transform_8, window_bounds = array<i64: 1, 128>}, {pipeline_mode = #tpu.pipeline_mode<synchronous>, transform_indices = @transform_9, window_bounds = array<i64: 128, 128>}, {pipeline_mode = #tpu.pipeline_mode<synchronous>, transform_indices = @transform_10, window_bounds = array<i64: 1, 128>}, {transform_indices = @transform_11, window_bounds = array<i64: 8, 128>}]} {
    %c0 = arith.constant 0 : index
    %c0_0 = arith.constant 0 : index
    %0 = vector.load %arg1[%c0, %c0_0] : memref<8x128xbf16, #tpu.memory_space<vmem>>, vector<8x128xbf16>
    %c0_1 = arith.constant 0 : index
    %c0_2 = arith.constant 0 : index
    %1 = vector.load %arg3[%c0_1, %c0_2] : memref<1x128xf32, #tpu.memory_space<vmem>>, vector<1x128xf32>
    %c0_3 = arith.constant 0 : index
    %c0_4 = arith.constant 0 : index
    %2 = vector.load %arg2[%c0_3, %c0_4] : memref<128x128xbf16, #tpu.memory_space<vmem>>, vector<128x128xbf16>
    %cst = arith.constant dense<0.000000e+00> : vector<8x128xf32>
    %3 = tpu.matmul %0, %2, %cst {dimension_numbers = #tpu.dot_dimension_numbers<[1], [0], [0], [1], [0, 0, 1, 1], [], []>} : vector<8x128xbf16>, vector<128x128xbf16>, vector<8x128xf32> -> vector<8x128xf32>
    %4 = vector.broadcast %1 : vector<1x128xf32> to vector<8x128xf32>
    %5 = arith.addf %3, %4 : vector<8x128xf32>
    %cst_5 = arith.constant 0.00999999977 : f32
    %6 = vector.broadcast %cst_5 : f32 to vector<8x128xf32>
    %7 = arith.mulf %6, %5 : vector<8x128xf32>
    %8 = arith.maximumf %5, %7 : vector<8x128xf32>
    %c0_6 = arith.constant 0 : index
    %c0_7 = arith.constant 0 : index
    %9 = vector.load %arg4[%c0_6, %c0_7] : memref<128x128xbf16, #tpu.memory_space<vmem>>, vector<128x128xbf16>
    %c0_8 = arith.constant 0 : index
    %c0_9 = arith.constant 0 : index
    %10 = vector.load %arg5[%c0_8, %c0_9] : memref<1x128xf32, #tpu.memory_space<vmem>>, vector<1x128xf32>
    %11 = arith.truncf %8 : vector<8x128xf32> to vector<8x128xbf16>
    %cst_10 = arith.constant dense<0.000000e+00> : vector<8x128xf32>
    %12 = tpu.matmul %11, %9, %cst_10 {dimension_numbers = #tpu.dot_dimension_numbers<[1], [0], [0], [1], [0, 0, 1, 1], [], []>} : vector<8x128xbf16>, vector<128x128xbf16>, vector<8x128xf32> -> vector<8x128xf32>
    %13 = vector.broadcast %10 : vector<1x128xf32> to vector<8x128xf32>
    %14 = arith.addf %12, %13 : vector<8x128xf32>
    %cst_11 = arith.constant 0.00999999977 : f32
    %15 = vector.broadcast %cst_11 : f32 to vector<8x128xf32>
    %16 = arith.mulf %15, %14 : vector<8x128xf32>
    %17 = arith.maximumf %14, %16 : vector<8x128xf32>
    %18 = arith.addf %17, %8 : vector<8x128xf32>
    %c0_12 = arith.constant 0 : index
    %c0_13 = arith.constant 0 : index
    %19 = vector.load %arg6[%c0_12, %c0_13] : memref<128x128xbf16, #tpu.memory_space<vmem>>, vector<128x128xbf16>
    %c0_14 = arith.constant 0 : index
    %c0_15 = arith.constant 0 : index
    %20 = vector.load %arg7[%c0_14, %c0_15] : memref<1x128xf32, #tpu.memory_space<vmem>>, vector<1x128xf32>
    %21 = arith.truncf %18 : vector<8x128xf32> to vector<8x128xbf16>
    %cst_16 = arith.constant dense<0.000000e+00> : vector<8x128xf32>
    %22 = tpu.matmul %21, %19, %cst_16 {dimension_numbers = #tpu.dot_dimension_numbers<[1], [0], [0], [1], [0, 0, 1, 1], [], []>} : vector<8x128xbf16>, vector<128x128xbf16>, vector<8x128xf32> -> vector<8x128xf32>
    %23 = vector.broadcast %20 : vector<1x128xf32> to vector<8x128xf32>
    %24 = arith.addf %22, %23 : vector<8x128xf32>
    %cst_17 = arith.constant 0.00999999977 : f32
    %25 = vector.broadcast %cst_17 : f32 to vector<8x128xf32>
    %26 = arith.mulf %25, %24 : vector<8x128xf32>
    %27 = arith.maximumf %24, %26 : vector<8x128xf32>
    %28 = arith.addf %27, %18 : vector<8x128xf32>
    %c0_18 = arith.constant 0 : index
    %c0_19 = arith.constant 0 : index
    %29 = vector.load %arg8[%c0_18, %c0_19] : memref<128x128xbf16, #tpu.memory_space<vmem>>, vector<128x128xbf16>
    %30 = arith.truncf %28 : vector<8x128xf32> to vector<8x128xbf16>
    %cst_20 = arith.constant dense<0.000000e+00> : vector<8x128xf32>
    %31 = tpu.matmul %30, %29, %cst_20 {dimension_numbers = #tpu.dot_dimension_numbers<[1], [0], [0], [1], [0, 0, 1, 1], [], []>} : vector<8x128xbf16>, vector<128x128xbf16>, vector<8x128xf32> -> vector<8x128xf32>
    %c0_21 = arith.constant 0 : index
    %c0_22 = arith.constant 0 : index
    %32 = vector.load %arg9[%c0_21, %c0_22] : memref<1x128xf32, #tpu.memory_space<vmem>>, vector<1x128xf32>
    %33 = vector.broadcast %32 : vector<1x128xf32> to vector<8x128xf32>
    %34 = arith.addf %31, %33 : vector<8x128xf32>
    %cst_23 = arith.constant 0.00999999977 : f32
    %35 = vector.broadcast %cst_23 : f32 to vector<8x128xf32>
    %36 = arith.mulf %35, %34 : vector<8x128xf32>
    %37 = arith.maximumf %34, %36 : vector<8x128xf32>
    %c0_24 = arith.constant 0 : index
    %c0_25 = arith.constant 0 : index
    %38 = vector.load %arg10[%c0_24, %c0_25] : memref<128x128xbf16, #tpu.memory_space<vmem>>, vector<128x128xbf16>
    %39 = arith.truncf %37 : vector<8x128xf32> to vector<8x128xbf16>
    %cst_26 = arith.constant dense<0.000000e+00> : vector<8x128xf32>
    %40 = tpu.matmul %39, %38, %cst_26 {dimension_numbers = #tpu.dot_dimension_numbers<[1], [0], [0], [1], [0, 0, 1, 1], [], []>} : vector<8x128xbf16>, vector<128x128xbf16>, vector<8x128xf32> -> vector<8x128xf32>
    %c0_27 = arith.constant 0 : index
    %c0_28 = arith.constant 0 : index
    %41 = vector.load %arg11[%c0_27, %c0_28] : memref<1x128xf32, #tpu.memory_space<vmem>>, vector<1x128xf32>
    %42 = vector.broadcast %41 : vector<1x128xf32> to vector<8x128xf32>
    %43 = arith.addf %40, %42 : vector<8x128xf32>
    %c0_29 = arith.constant 0 : index
    %c0_30 = arith.constant 0 : index
    %44 = vector.load %arg12[%c0_29, %c0_30] : memref<8x128xf32, #tpu.memory_space<vmem>>, vector<8x128xf32>
    tpu.vector_store %arg12[%c0_29, %c0_30], %43 {strides = array<i32>} : memref<8x128xf32, #tpu.memory_space<vmem>>, vector<8x128xf32>,
    return
  }
  func.func @transform_0(%arg0: i32) -> (i32, i32) {
    %c0_i32 = arith.constant 0 : i32
    %c0_i32_0 = arith.constant 0 : i32
    return %arg0, %c0_i32 : i32, i32
  }
  func.func @transform_1(%arg0: i32) -> (i32, i32) {
    %c0_i32 = arith.constant 0 : i32
    %c0_i32_0 = arith.constant 0 : i32
    %c0_i32_1 = arith.constant 0 : i32
    return %c0_i32, %c0_i32_0 : i32, i32
  }
  func.func @transform_2(%arg0: i32) -> (i32, i32) {
    %c0_i32 = arith.constant 0 : i32
    %c0_i32_0 = arith.constant 0 : i32
    %c0_i32_1 = arith.constant 0 : i32
    return %c0_i32, %c0_i32_0 : i32, i32
  }
  func.func @transform_3(%arg0: i32) -> (i32, i32) {
    %c0_i32 = arith.constant 0 : i32
    %c0_i32_0 = arith.constant 0 : i32
    %c0_i32_1 = arith.constant 0 : i32
    return %c0_i32, %c0_i32_0 : i32, i32
  }
  func.func @transform_4(%arg0: i32) -> (i32, i32) {
    %c0_i32 = arith.constant 0 : i32
    %c0_i32_0 = arith.constant 0 : i32
    %c0_i32_1 = arith.constant 0 : i32
    return %c0_i32, %c0_i32_0 : i32, i32
  }
  func.func @transform_5(%arg0: i32) -> (i32, i32) {
    %c0_i32 = arith.constant 0 : i32
    %c0_i32_0 = arith.constant 0 : i32
    %c0_i32_1 = arith.constant 0 : i32
    return %c0_i32, %c0_i32_0 : i32, i32
  }
  func.func @transform_6(%arg0: i32) -> (i32, i32) {
    %c0_i32 = arith.constant 0 : i32
    %c0_i32_0 = arith.constant 0 : i32
    %c0_i32_1 = arith.constant 0 : i32
    return %c0_i32, %c0_i32_0 : i32, i32
  }
  func.func @transform_7(%arg0: i32) -> (i32, i32) {
    %c0_i32 = arith.constant 0 : i32
    %c0_i32_0 = arith.constant 0 : i32
    %c0_i32_1 = arith.constant 0 : i32
    return %c0_i32, %c0_i32_0 : i32, i32
  }
  func.func @transform_8(%arg0: i32) -> (i32, i32) {
    %c0_i32 = arith.constant 0 : i32
    %c0_i32_0 = arith.constant 0 : i32
    %c0_i32_1 = arith.constant 0 : i32
    return %c0_i32, %c0_i32_0 : i32, i32
  }
  func.func @transform_9(%arg0: i32) -> (i32, i32) {
    %c0_i32 = arith.constant 0 : i32
    %c0_i32_0 = arith.constant 0 : i32
    %c0_i32_1 = arith.constant 0 : i32
    return %c0_i32, %c0_i32_0 : i32, i32
  }
  func.func @transform_10(%arg0: i32) -> (i32, i32) {
    %c0_i32 = arith.constant 0 : i32
    %c0_i32_0 = arith.constant 0 : i32
    %c0_i32_1 = arith.constant 0 : i32
    return %c0_i32, %c0_i32_0 : i32, i32
  }
  func.func @transform_11(%arg0: i32) -> (i32, i32) {
    %c0_i32 = arith.constant 0 : i32
    %c0_i32_0 = arith.constant 0 : i32
    return %arg0, %c0_i32 : i32, i32
  }
}

</mosaic_0001>

<llo_original>
// kernel: fully_connected_model_forward.1
$region0: #{fully_connected_model_forward.1}
  #allocation0 [shape = 'u32[]', space=smem, size = 0x4, offset = 0x4, fixed_abs, tag = 'smem constant byte address 0x4 - core index']
  #allocation1 [shape = 'u32[72,128]{1,0:T(1,128)}', space=vmem, size = 0x9000, scoped, tag = 'internal scratch']
  %s0 = inlined_call_operand.vmem [shape: bf16[8,128], index: 0, kind: input, shape index: {}]
  %s1 = inlined_call_operand.vmem [shape: bf16[128,128], index: 1, kind: input, shape index: {}]
  %s2 = inlined_call_operand.vmem [shape: f32[1,128], index: 2, kind: input, shape index: {}]
  %s3 = inlined_call_operand.vmem [shape: bf16[128,128], index: 3, kind: input, shape index: {}]
  %s4 = inlined_call_operand.vmem [shape: f32[1,128], index: 4, kind: input, shape index: {}]
  %s5 = inlined_call_operand.vmem [shape: bf16[128,128], index: 5, kind: input, shape index: {}]
  %s6 = inlined_call_operand.vmem [shape: f32[1,128], index: 6, kind: input, shape index: {}]
  %s7 = inlined_call_operand.vmem [shape: bf16[128,128], index: 7, kind: input, shape index: {}]
  %s8 = inlined_call_operand.vmem [shape: f32[1,128], index: 8, kind: input, shape index: {}]
  %s9 = inlined_call_operand.vmem [shape: bf16[128,128], index: 9, kind: input, shape index: {}]
  %s10 = inlined_call_operand.vmem [shape: f32[1,128], index: 10, kind: input, shape index: {}]
  %s11 = inlined_call_operand.hbm [shape: f32[8,128], index: 11, kind: output, shape index: {}]
  %s12 = sld [smem:[#allocation0]]
  $region54: #{fully_connected_model_forward.1} parent=0
    _
  %s14 = ssub.s32 1, %s12
  %s15 = scalar_select 0, %s14, %s12
  $region1: #{fully_connected_model_forward.1} parent=0
    #allocation2 [shape = 'u8[4096]{0}', space=vmem, size = 0x1000, scoped, tag = 'output window, operand 0, single buffered']
    #allocation3 [shape = 's32[1]{0}', space=sflag, size = 0x4, scoped, tag = 'scoped memory for fully_connected_model_forward.1']
    %16 = vsyncpa [#allocation3], 0
    // Predicated region
    $region2: #{fully_connected_model_forward.1} parent=1 // pred_check
      _
    $region3: #{fully_connected_model_forward.1} parent=1 // pred_check_branch
      %18 = sbr.rel (0) target = $region5
    $region4: #{fully_connected_model_forward.1} parent=1 // pred_region
      _
    $region5: #{fully_connected_model_forward.1} parent=1 // pred_fallthru
      _
    // Predicated region
    $region6: #{fully_connected_model_forward.1} parent=1 // pred_check
      _
    $region7: #{fully_connected_model_forward.1} parent=1 // pred_check_branch
      %20 = sbr.rel (0) target = $region9
    $region8: #{fully_connected_model_forward.1} parent=1 // pred_region
      _
    $region9: #{fully_connected_model_forward.1} parent=1 // pred_fallthru
      _
    // Predicated region
    $region10: #{fully_connected_model_forward.1} parent=1 // pred_check
      _
    $region11: #{fully_connected_model_forward.1} parent=1 // pred_check_branch
      %22 = sbr.rel (0) target = $region13
    $region12: #{fully_connected_model_forward.1} parent=1 // pred_region
      _
    $region13: #{fully_connected_model_forward.1} parent=1 // pred_fallthru
      _
    // Predicated region
    $region14: #{fully_connected_model_forward.1} parent=1 // pred_check
      _
    $region15: #{fully_connected_model_forward.1} parent=1 // pred_check_branch
      %24 = sbr.rel (0) target = $region17
    $region16: #{fully_connected_model_forward.1} parent=1 // pred_region
      _
    $region17: #{fully_connected_model_forward.1} parent=1 // pred_fallthru
      _
    // Predicated region
    $region18: #{fully_connected_model_forward.1} parent=1 // pred_check
      _
    $region19: #{fully_connected_model_forward.1} parent=1 // pred_check_branch
      %26 = sbr.rel (0) target = $region21
    $region20: #{fully_connected_model_forward.1} parent=1 // pred_region
      _
    $region21: #{fully_connected_model_forward.1} parent=1 // pred_fallthru
      _
    // Predicated region
    $region22: #{fully_connected_model_forward.1} parent=1 // pred_check
      _
    $region23: #{fully_connected_model_forward.1} parent=1 // pred_check_branch
      %28 = sbr.rel (0) target = $region25
    $region24: #{fully_connected_model_forward.1} parent=1 // pred_region
      _
    $region25: #{fully_connected_model_forward.1} parent=1 // pred_fallthru
      _
    // Predicated region
    $region26: #{fully_connected_model_forward.1} parent=1 // pred_check
      _
    $region27: #{fully_connected_model_forward.1} parent=1 // pred_check_branch
      %30 = sbr.rel (0) target = $region29
    $region28: #{fully_connected_model_forward.1} parent=1 // pred_region
      _
    $region29: #{fully_connected_model_forward.1} parent=1 // pred_fallthru
      _
    // Predicated region
    $region30: #{fully_connected_model_forward.1} parent=1 // pred_check
      _
    $region31: #{fully_connected_model_forward.1} parent=1 // pred_check_branch
      %32 = sbr.rel (0) target = $region33
    $region32: #{fully_connected_model_forward.1} parent=1 // pred_region
      _
    $region33: #{fully_connected_model_forward.1} parent=1 // pred_fallthru
      _
    // Predicated region
    $region34: #{fully_connected_model_forward.1} parent=1 // pred_check
      _
    $region35: #{fully_connected_model_forward.1} parent=1 // pred_check_branch
      %34 = sbr.rel (0) target = $region37
    $region36: #{fully_connected_model_forward.1} parent=1 // pred_region
      _
    $region37: #{fully_connected_model_forward.1} parent=1 // pred_fallthru
      _
    // Predicated region
    $region38: #{fully_connected_model_forward.1} parent=1 // pred_check
      _
    $region39: #{fully_connected_model_forward.1} parent=1 // pred_check_branch
      %36 = sbr.rel (0) target = $region41
    $region40: #{fully_connected_model_forward.1} parent=1 // pred_region
      _
    $region41: #{fully_connected_model_forward.1} parent=1 // pred_fallthru
      _
    // Predicated region
    $region42: #{fully_connected_model_forward.1} parent=1 // pred_check
      _
    $region43: #{fully_connected_model_forward.1} parent=1 // pred_check_branch
      %38 = sbr.rel (0) target = $region45
    $region44: #{fully_connected_model_forward.1} parent=1 // pred_region
      _
    $region45: #{fully_connected_model_forward.1} parent=1 // pred_fallthru
      _
    %v39 = vld [vmem:[%s0] sm:$0xf]
    %v40 = vld [vmem:[%s2] sm:$0x1]
    %v41 = vld [vmem:[%s1] sm:$0xf]
    %v42 = vld [vmem:[%s1 + $0x4] sm:$0xf]
    %v43 = vld [vmem:[%s1 + $0x8] sm:$0xf]
    %v44 = vld [vmem:[%s1 + $0xc] sm:$0xf]
    %v45 = vld [vmem:[%s1 + $0x10] sm:$0xf]
    %v46 = vld [vmem:[%s1 + $0x14] sm:$0xf]
    %v47 = vld [vmem:[%s1 + $0x18] sm:$0xf]
    %v48 = vld [vmem:[%s1 + $0x1c] sm:$0xf]
    %v49 = vld [vmem:[%s1 + $0x20] sm:$0xf]
    %v50 = vld [vmem:[%s1 + $0x24] sm:$0xf]
    %v51 = vld [vmem:[%s1 + $0x28] sm:$0xf]
    %v52 = vld [vmem:[%s1 + $0x2c] sm:$0xf]
    %v53 = vld [vmem:[%s1 + $0x30] sm:$0xf]
    %v54 = vld [vmem:[%s1 + $0x34] sm:$0xf]
    %v55 = vld [vmem:[%s1 + $0x38] sm:$0xf]
    %v56 = vld [vmem:[%s1 + $0x3c] sm:$0xf]
    %v58 = vperm.slane %v40, 0
    %v76 = vunpack.c.l.b16 %v41
    %v77 = vunpack.c.l.b16 %v42
    %v78 = vunpack.c.l.b16 %v43
    %v79 = vunpack.c.l.b16 %v44
    %v80 = vunpack.c.l.b16 %v45
    %v81 = vunpack.c.l.b16 %v46
    %v82 = vunpack.c.l.b16 %v47
    %v83 = vunpack.c.l.b16 %v48
    %v84 = vunpack.c.l.b16 %v49
    %v85 = vunpack.c.l.b16 %v50
    %v86 = vunpack.c.l.b16 %v51
    %v87 = vunpack.c.l.b16 %v52
    %v88 = vunpack.c.l.b16 %v53
    %v89 = vunpack.c.l.b16 %v54
    %v90 = vunpack.c.l.b16 %v55
    %v91 = vunpack.c.l.b16 %v56
    %v92 = vpack.c.b16 %v77, %v76
    %v93 = vpack.c.b16 %v79, %v78
    %v94 = vpack.c.b16 %v81, %v80
    %v95 = vpack.c.b16 %v83, %v82
    %v96 = vpack.c.b16 %v85, %v84
    %v97 = vpack.c.b16 %v87, %v86
    %v98 = vpack.c.b16 %v89, %v88
    %v99 = vpack.c.b16 %v91, %v90
    %108 = vmatpush.bf16.msra.mxu0 %v99
    %109 = vmatpush.bf16.msra.mxu0 %v98
    %110 = vmatpush.bf16.msra.mxu0 %v97
    %111 = vmatpush.bf16.msra.mxu0 %v96
    %112 = vmatpush.bf16.msra.mxu0 %v95
    %113 = vmatpush.bf16.msra.mxu0 %v94
    %114 = vmatpush.bf16.msra.mxu0 %v93
    %115 = vmatpush.bf16.msra.mxu0 %v92
    %116 = vmatmul.bf16.gmra.mxu0 %v39
    %v117 = vpop.f32.mrf.mxu0
    %v118 = vadd.f32 %v58, %v117
    %v119 = vpop.f32.mrf.mxu0
    %120 = vdwg.mxu0
    %v121 = vmul.f32 %v118, 0.01
    %v122 = vmax.f32 %v118, %v121
    %v123 = vld [vmem:[%s3] sm:$0xf]
    %v124 = vld [vmem:[%s3 + $0x4] sm:$0xf]
    %v125 = vld [vmem:[%s3 + $0x8] sm:$0xf]
    %v126 = vld [vmem:[%s3 + $0xc] sm:$0xf]
    %v127 = vld [vmem:[%s3 + $0x10] sm:$0xf]
    %v128 = vld [vmem:[%s3 + $0x14] sm:$0xf]
    %v129 = vld [vmem:[%s3 + $0x18] sm:$0xf]
    %v130 = vld [vmem:[%s3 + $0x1c] sm:$0xf]
    %v131 = vld [vmem:[%s3 + $0x20] sm:$0xf]
    %v132 = vld [vmem:[%s3 + $0x24] sm:$0xf]
    %v133 = vld [vmem:[%s3 + $0x28] sm:$0xf]
    %v134 = vld [vmem:[%s3 + $0x2c] sm:$0xf]
    %v135 = vld [vmem:[%s3 + $0x30] sm:$0xf]
    %v136 = vld [vmem:[%s3 + $0x34] sm:$0xf]
    %v137 = vld [vmem:[%s3 + $0x38] sm:$0xf]
    %v138 = vld [vmem:[%s3 + $0x3c] sm:$0xf]
    %v139 = vld [vmem:[%s4] sm:$0x1]
    %v140 = vpack.c.bf16 %v122, %v122
    %v142 = vperm.slane %v139, 0
    %v160 = vunpack.c.l.b16 %v123
    %v161 = vunpack.c.l.b16 %v124
    %v162 = vunpack.c.l.b16 %v125
    %v163 = vunpack.c.l.b16 %v126
    %v164 = vunpack.c.l.b16 %v127
    %v165 = vunpack.c.l.b16 %v128
    %v166 = vunpack.c.l.b16 %v129
    %v167 = vunpack.c.l.b16 %v130
    %v168 = vunpack.c.l.b16 %v131
    %v169 = vunpack.c.l.b16 %v132
    %v170 = vunpack.c.l.b16 %v133
    %v171 = vunpack.c.l.b16 %v134
    %v172 = vunpack.c.l.b16 %v135
    %v173 = vunpack.c.l.b16 %v136
    %v174 = vunpack.c.l.b16 %v137
    %v175 = vunpack.c.l.b16 %v138
    %v176 = vpack.c.b16 %v161, %v160
    %v177 = vpack.c.b16 %v163, %v162
    %v178 = vpack.c.b16 %v165, %v164
    %v179 = vpack.c.b16 %v167, %v166
    %v180 = vpack.c.b16 %v169, %v168
    %v181 = vpack.c.b16 %v171, %v170
    %v182 = vpack.c.b16 %v173, %v172
    %v183 = vpack.c.b16 %v175, %v174
    %192 = vmatpush.bf16.msra.mxu0 %v183
    %193 = vmatpush.bf16.msra.mxu0 %v182
    %194 = vmatpush.bf16.msra.mxu0 %v181
    %195 = vmatpush.bf16.msra.mxu0 %v180
    %196 = vmatpush.bf16.msra.mxu0 %v179
    %197 = vmatpush.bf16.msra.mxu0 %v178
    %198 = vmatpush.bf16.msra.mxu0 %v177
    %199 = vmatpush.bf16.msra.mxu0 %v176
    %200 = vmatmul.bf16.gmra.mxu0 %v140
    %v201 = vpop.f32.mrf.mxu0
    %v202 = vadd.f32 %v142, %v201
    %v203 = vpop.f32.mrf.mxu0
    %204 = vdwg.mxu0
    %v205 = vmul.f32 %v202, 0.01
    %v206 = vmax.f32 %v202, %v205
    %v207 = vadd.f32 %v206, %v122
    %v208 = vld [vmem:[%s5] sm:$0xf]
    %v209 = vld [vmem:[%s5 + $0x4] sm:$0xf]
    %v210 = vld [vmem:[%s5 + $0x8] sm:$0xf]
    %v211 = vld [vmem:[%s5 + $0xc] sm:$0xf]
    %v212 = vld [vmem:[%s5 + $0x10] sm:$0xf]
    %v213 = vld [vmem:[%s5 + $0x14] sm:$0xf]
    %v214 = vld [vmem:[%s5 + $0x18] sm:$0xf]
    %v215 = vld [vmem:[%s5 + $0x1c] sm:$0xf]
    %v216 = vld [vmem:[%s5 + $0x20] sm:$0xf]
    %v217 = vld [vmem:[%s5 + $0x24] sm:$0xf]
    %v218 = vld [vmem:[%s5 + $0x28] sm:$0xf]
    %v219 = vld [vmem:[%s5 + $0x2c] sm:$0xf]
    %v220 = vld [vmem:[%s5 + $0x30] sm:$0xf]
    %v221 = vld [vmem:[%s5 + $0x34] sm:$0xf]
    %v222 = vld [vmem:[%s5 + $0x38] sm:$0xf]
    %v223 = vld [vmem:[%s5 + $0x3c] sm:$0xf]
    %v224 = vld [vmem:[%s6] sm:$0x1]
    %v225 = vpack.c.bf16 %v207, %v207
    %v227 = vperm.slane %v224, 0
    %v245 = vunpack.c.l.b16 %v208
    %v246 = vunpack.c.l.b16 %v209
    %v247 = vunpack.c.l.b16 %v210
    %v248 = vunpack.c.l.b16 %v211
    %v249 = vunpack.c.l.b16 %v212
    %v250 = vunpack.c.l.b16 %v213
    %v251 = vunpack.c.l.b16 %v214
    %v252 = vunpack.c.l.b16 %v215
    %v253 = vunpack.c.l.b16 %v216
    %v254 = vunpack.c.l.b16 %v217
    %v255 = vunpack.c.l.b16 %v218
    %v256 = vunpack.c.l.b16 %v219
    %v257 = vunpack.c.l.b16 %v220
    %v258 = vunpack.c.l.b16 %v221
    %v259 = vunpack.c.l.b16 %v222
    %v260 = vunpack.c.l.b16 %v223
    %v261 = vpack.c.b16 %v246, %v245
    %v262 = vpack.c.b16 %v248, %v247
    %v263 = vpack.c.b16 %v250, %v249
    %v264 = vpack.c.b16 %v252, %v251
    %v265 = vpack.c.b16 %v254, %v253
    %v266 = vpack.c.b16 %v256, %v255
    %v267 = vpack.c.b16 %v258, %v257
    %v268 = vpack.c.b16 %v260, %v259
    %277 = vmatpush.bf16.msra.mxu0 %v268
    %278 = vmatpush.bf16.msra.mxu0 %v267
    %279 = vmatpush.bf16.msra.mxu0 %v266
    %280 = vmatpush.bf16.msra.mxu0 %v265
    %281 = vmatpush.bf16.msra.mxu0 %v264
    %282 = vmatpush.bf16.msra.mxu0 %v263
    %283 = vmatpush.bf16.msra.mxu0 %v262
    %284 = vmatpush.bf16.msra.mxu0 %v261
    %285 = vmatmul.bf16.gmra.mxu0 %v225
    %v286 = vpop.f32.mrf.mxu0
    %v287 = vadd.f32 %v227, %v286
    %v288 = vpop.f32.mrf.mxu0
    %289 = vdwg.mxu0
    %v290 = vmul.f32 %v287, 0.01
    %v291 = vmax.f32 %v287, %v290
    %v292 = vadd.f32 %v291, %v207
    %v293 = vld [vmem:[%s7] sm:$0xf]
    %v294 = vld [vmem:[%s7 + $0x4] sm:$0xf]
    %v295 = vld [vmem:[%s7 + $0x8] sm:$0xf]
    %v296 = vld [vmem:[%s7 + $0xc] sm:$0xf]
    %v297 = vld [vmem:[%s7 + $0x10] sm:$0xf]
    %v298 = vld [vmem:[%s7 + $0x14] sm:$0xf]
    %v299 = vld [vmem:[%s7 + $0x18] sm:$0xf]
    %v300 = vld [vmem:[%s7 + $0x1c] sm:$0xf]
    %v301 = vld [vmem:[%s7 + $0x20] sm:$0xf]
    %v302 = vld [vmem:[%s7 + $0x24] sm:$0xf]
    %v303 = vld [vmem:[%s7 + $0x28] sm:$0xf]
    %v304 = vld [vmem:[%s7 + $0x2c] sm:$0xf]
    %v305 = vld [vmem:[%s7 + $0x30] sm:$0xf]
    %v306 = vld [vmem:[%s7 + $0x34] sm:$0xf]
    %v307 = vld [vmem:[%s7 + $0x38] sm:$0xf]
    %v308 = vld [vmem:[%s7 + $0x3c] sm:$0xf]
    %v309 = vpack.c.bf16 %v292, %v292
    %v310 = vld [vmem:[%s8] sm:$0x1]
    %v312 = vperm.slane %v310, 0
    %v330 = vunpack.c.l.b16 %v293
    %v331 = vunpack.c.l.b16 %v294
    %v332 = vunpack.c.l.b16 %v295
    %v333 = vunpack.c.l.b16 %v296
    %v334 = vunpack.c.l.b16 %v297
    %v335 = vunpack.c.l.b16 %v298
    %v336 = vunpack.c.l.b16 %v299
    %v337 = vunpack.c.l.b16 %v300
    %v338 = vunpack.c.l.b16 %v301
    %v339 = vunpack.c.l.b16 %v302
    %v340 = vunpack.c.l.b16 %v303
    %v341 = vunpack.c.l.b16 %v304
    %v342 = vunpack.c.l.b16 %v305
    %v343 = vunpack.c.l.b16 %v306
    %v344 = vunpack.c.l.b16 %v307
    %v345 = vunpack.c.l.b16 %v308
    %v346 = vpack.c.b16 %v331, %v330
    %v347 = vpack.c.b16 %v333, %v332
    %v348 = vpack.c.b16 %v335, %v334
    %v349 = vpack.c.b16 %v337, %v336
    %v350 = vpack.c.b16 %v339, %v338
    %v351 = vpack.c.b16 %v341, %v340
    %v352 = vpack.c.b16 %v343, %v342
    %v353 = vpack.c.b16 %v345, %v344
    %362 = vmatpush.bf16.msra.mxu0 %v353
    %363 = vmatpush.bf16.msra.mxu0 %v352
    %364 = vmatpush.bf16.msra.mxu0 %v351
    %365 = vmatpush.bf16.msra.mxu0 %v350
    %366 = vmatpush.bf16.msra.mxu0 %v349
    %367 = vmatpush.bf16.msra.mxu0 %v348
    %368 = vmatpush.bf16.msra.mxu0 %v347
    %369 = vmatpush.bf16.msra.mxu0 %v346
    %370 = vmatmul.bf16.gmra.mxu0 %v309
    %v371 = vpop.f32.mrf.mxu0
    %v372 = vadd.f32 %v312, %v371
    %v373 = vpop.f32.mrf.mxu0
    %374 = vdwg.mxu0
    %v375 = vmul.f32 %v372, 0.01
    %v376 = vmax.f32 %v372, %v375
    %v377 = vld [vmem:[%s9] sm:$0xf]
    %v378 = vld [vmem:[%s9 + $0x4] sm:$0xf]
    %v379 = vld [vmem:[%s9 + $0x8] sm:$0xf]
    %v380 = vld [vmem:[%s9 + $0xc] sm:$0xf]
    %v381 = vld [vmem:[%s9 + $0x10] sm:$0xf]
    %v382 = vld [vmem:[%s9 + $0x14] sm:$0xf]
    %v383 = vld [vmem:[%s9 + $0x18] sm:$0xf]
    %v384 = vld [vmem:[%s9 + $0x1c] sm:$0xf]
    %v385 = vld [vmem:[%s9 + $0x20] sm:$0xf]
    %v386 = vld [vmem:[%s9 + $0x24] sm:$0xf]
    %v387 = vld [vmem:[%s9 + $0x28] sm:$0xf]
    %v388 = vld [vmem:[%s9 + $0x2c] sm:$0xf]
    %v389 = vld [vmem:[%s9 + $0x30] sm:$0xf]
    %v390 = vld [vmem:[%s9 + $0x34] sm:$0xf]
    %v391 = vld [vmem:[%s9 + $0x38] sm:$0xf]
    %v392 = vld [vmem:[%s9 + $0x3c] sm:$0xf]
    %v393 = vpack.c.bf16 %v376, %v376
    %v394 = vld [vmem:[%s10] sm:$0x1]
    %v396 = vperm.slane %v394, 0
    %v414 = vunpack.c.l.b16 %v377
    %v415 = vunpack.c.l.b16 %v378
    %v416 = vunpack.c.l.b16 %v379
    %v417 = vunpack.c.l.b16 %v380
    %v418 = vunpack.c.l.b16 %v381
    %v419 = vunpack.c.l.b16 %v382
    %v420 = vunpack.c.l.b16 %v383
    %v421 = vunpack.c.l.b16 %v384
    %v422 = vunpack.c.l.b16 %v385
    %v423 = vunpack.c.l.b16 %v386
    %v424 = vunpack.c.l.b16 %v387
    %v425 = vunpack.c.l.b16 %v388
    %v426 = vunpack.c.l.b16 %v389
    %v427 = vunpack.c.l.b16 %v390
    %v428 = vunpack.c.l.b16 %v391
    %v429 = vunpack.c.l.b16 %v392
    %v430 = vpack.c.b16 %v415, %v414
    %v431 = vpack.c.b16 %v417, %v416
    %v432 = vpack.c.b16 %v419, %v418
    %v433 = vpack.c.b16 %v421, %v420
    %v434 = vpack.c.b16 %v423, %v422
    %v435 = vpack.c.b16 %v425, %v424
    %v436 = vpack.c.b16 %v427, %v426
    %v437 = vpack.c.b16 %v429, %v428
    %446 = vmatpush.bf16.msra.mxu0 %v437
    %447 = vmatpush.bf16.msra.mxu0 %v436
    %448 = vmatpush.bf16.msra.mxu0 %v435
    %449 = vmatpush.bf16.msra.mxu0 %v434
    %450 = vmatpush.bf16.msra.mxu0 %v433
    %451 = vmatpush.bf16.msra.mxu0 %v432
    %452 = vmatpush.bf16.msra.mxu0 %v431
    %453 = vmatpush.bf16.msra.mxu0 %v430
    %454 = vmatmul.bf16.gmra.mxu0 %v393
    %v455 = vpop.f32.mrf.mxu0
    %v456 = vadd.f32 %v396, %v455
    %v457 = vpop.f32.mrf.mxu0
    %458 = vdwg.mxu0
    %459 = vst [vmem:[#allocation2] sm:$0xff] %v456
    // Predicated region
    $region46: #{fully_connected_model_forward.1} parent=1 // pred_check
      _
    $region47: #{fully_connected_model_forward.1} parent=1 // pred_check_branch
      %461 = sbr.rel (0) target = $region49
    $region48: #{fully_connected_model_forward.1} parent=1 // pred_region
      %463 = vsyncadd [#allocation3], 0
      %s465 = sshll.u32 [#allocation2], 4
      %s466 = int_to_ptr.vmem [resolvable:$true] %s465
      %s467 = sshll.u32 %s11, 4
      %s468 = int_to_ptr.hbm [resolvable:$true] %s467
      %470 = dma.vmem_to_hbm [thread:$0]  %s466, 128, %s468, [#allocation3]
    $region49: #{fully_connected_model_forward.1} parent=1 // pred_fallthru
      _
    // Predicated region
    $region50: #{fully_connected_model_forward.1} parent=1 // pred_check
      _
    $region51: #{fully_connected_model_forward.1} parent=1 // pred_check_branch
      %472 = sbr.rel (0) target = $region53
    $region52: #{fully_connected_model_forward.1} parent=1 // pred_region
      %474 = dma.done [#allocation3], 128
    $region53: #{fully_connected_model_forward.1} parent=1 // pred_fallthru
      _
    %475 = vsyncpa [#allocation3], 1

</llo_original>
